<compile_context>
chip_gen: v7x
topology: tpu7x:2x2x1
jax: 0.10.0
libtpu: 0.0.40
codegen_flags: <defaults>
</compile_context>

<pallas_src>
import jax
import jax.numpy as jnp
from jax.experimental import pallas as pl
from jax.experimental.pallas import tpu as pltpu

# ---- small config consistent with the module ----
B        = 2       # batch
L        = 16      # sequence length
N_MELS   = 32      # input mel channels
HID      = 32      # hidden_dim
K        = 3       # conv_kernel  (=> stride = (K-1)//2 = 1)
N_LAYERS = 2       # => n_layers - 1 = 1 residual conv block
N_BLOCKS = N_LAYERS - 1
BL       = B * L
BN_EPS   = 1e-5    # PyTorch BatchNorm default

W_COLS = 3 * HID * (1 + 2 * N_BLOCKS) + HID   # packed weight slab lane count (= 320)
B_COLS = HID * (2 + 2 * N_BLOCKS)             # packed bias slab lane count   (= 128)

assert N_MELS == HID, "single packed (Cin, cols) weight slab assumes n_mels == hidden_dim"
assert (L & (L - 1)) == 0, "kernel derives the intra-batch position with a bitwise AND"


def audio_encoder_kernel(xk_ref, w_ref, b_ref, out_ref):
    """Whole forward for the full batch in one invocation.

    xk_ref : (B*L, N_MELS+1) bf16  [ mel features | keep column (1 = valid, 0 = masked) ]
    w_ref  : (HID, W_COLS)   bf16  [ prenet taps | block conv taps ... | out_linear ] (BN folded)
    b_ref  : (1, B_COLS)     f32   [ prenet bias | block biases ...    | out_linear bias ]
    out_ref: (B*L, HID)      f32
    """
    xk = xk_ref[...]
    w = w_ref[...]
    b = b_ref[...]

    # Hoisted once and reused everywhere (JAX does not CSE broadcast_in_dim):
    #   keep       : padding mask broadcast to the full (BL, HID) tile
    #   not_first / not_last : batch-boundary masks that emulate the zero "same" padding after
    #                          the sublane rolls (rolls wrap around the flattened B*L axis).
    keep = jnp.broadcast_to(xk[:, N_MELS:N_MELS + 1].astype(jnp.float32), (BL, HID))
    pos = jax.lax.broadcasted_iota(jnp.int32, (BL, HID), 0) & (L - 1)   # t within its batch
    not_first = (pos != 0).astype(jnp.float32)
    not_last = (pos != L - 1).astype(jnp.float32)

    def conv_bn_relu(act_bf16, wcol, bcol):
        # One MXU push: (BL, Cin) @ (Cin, 3*HID); the K taps are lane slices of the result.
        y = jnp.dot(act_bf16, w[:, wcol:wcol + 3 * HID],
                    preferred_element_type=jnp.float32)
        y0 = y[:, 0:HID]
        y1 = y[:, HID:2 * HID]
        y2 = y[:, 2 * HID:3 * HID]
        # same-padded K=3 conv: out[t] = y0[t-1] + y1[t] + y2[t+1].
        # Time shifts are XLU sublane rolls (shift BL-1 == -1 mod BL); the boundary masks
        # zero the rows that wrapped across a batch boundary (VPU selects, no MXU work).
        out = (not_first * pltpu.roll(y0, shift=1, axis=0)
               + y1
               + not_last * pltpu.roll(y2, shift=BL - 1, axis=0)
               + b[:, bcol:bcol + HID])
        # BatchNorm is folded into w/b; Dropout is an eval-mode no-op.
        return jnp.maximum(out, 0.0)

    # prenet: Conv -> BN -> ReLU -> Dropout, then masked_fill(mask, 0)
    h = conv_bn_relu(xk[:, 0:N_MELS], 0, 0) * keep
    residual = h

    # residual conv blocks: (Conv->BN->ReLU->Drop) x2, masked_fill, + residual
    for i in range(N_BLOCKS):
        h = conv_bn_relu(h.astype(jnp.bfloat16), 3 * HID * (1 + 2 * i), HID * (1 + 2 * i))
        h = conv_bn_relu(h.astype(jnp.bfloat16), 3 * HID * (2 + 2 * i), HID * (2 + 2 * i))
        h = h * keep + residual
        residual = h

    # level == 'local': out_linear then masked_fill.  (The (b,c,l)->(b,l,c) transpose of the
    # reference is a no-op: activations already live in (row=(b,t), lane=channel) layout.)
    w_out = w[:, 3 * HID * (1 + 2 * N_BLOCKS):3 * HID * (1 + 2 * N_BLOCKS) + HID]
    b_out = b[:, HID * (1 + 2 * N_BLOCKS):HID * (2 + 2 * N_BLOCKS)]
    out = jnp.dot(h.astype(jnp.bfloat16), w_out, preferred_element_type=jnp.float32) + b_out
    # TODO(synk): HID=32 < 128 lanes -> masked partial store; acceptable at this size.
    out_ref[...] = out * keep


# ------------------------- host-side parameter handling -------------------------

def init_params(key):
    ks = iter(jax.random.split(key, 64))

    def w(shape, scale=0.1):
        return jax.random.normal(next(ks), shape, jnp.float32) * scale

    def bn(c):
        return dict(gamma=1.0 + 0.1 * jax.random.normal(next(ks), (c,), jnp.float32),
                    beta=0.1 * jax.random.normal(next(ks), (c,), jnp.float32),
                    mean=0.1 * jax.random.normal(next(ks), (c,), jnp.float32),
                    var=jax.random.uniform(next(ks), (c,), jnp.float32, 0.5, 1.5))

    return dict(
        w_pre=w((HID, N_MELS, K)), b_pre=w((HID,)), bn_pre=bn(HID),      # prenet Conv + BN
        blocks=[dict(w1=w((HID, HID, K)), b1=w((HID,)), bn1=bn(HID),
                     w2=w((HID, HID, K)), b2=w((HID,)), bn2=bn(HID))
                for _ in range(N_BLOCKS)],
        w_out=w((HID, HID)), b_out=w((HID,)),                            # nn.Linear (out, in)
    )


def _fold_conv_bn(Wc, bc, bn):
    """Fold eval-mode BatchNorm into conv weight/bias; lay out as (Cin, K*Cout) tap columns."""
    s = bn['gamma'] / jnp.sqrt(bn['var'] + BN_EPS)                       # (Cout,)
    Wf = Wc * s[:, None, None]                                           # (Cout, Cin, K)
    bf = (bc - bn['mean']) * s + bn['beta']                              # (Cout,)
    w_cat = jnp.concatenate([Wf[:, :, k].T for k in range(K)], axis=1)   # (Cin, K*Cout)
    return w_cat, bf


def pack_params(p):
    """One-time packing into a single bf16 weight slab and a single f32 bias row."""
    cols, biases = [], []
    w_pre, b_pre = _fold_conv_bn(p['w_pre'], p['b_pre'], p['bn_pre'])
    cols.append(w_pre)
    biases.append(b_pre)
    for blk in p['blocks']:
        w1, b1 = _fold_conv_bn(blk['w1'], blk['b1'], blk['bn1'])
        w2, b2 = _fold_conv_bn(blk['w2'], blk['b2'], blk['bn2'])
        cols += [w1, w2]
        biases += [b1, b2]
    cols.append(p['w_out'].T)                    # nn.Linear: y = x @ W.T + b
    biases.append(p['b_out'])
    w_all = jnp.concatenate(cols, axis=1).astype(jnp.bfloat16)   # (HID, W_COLS) bf16
    b_all = jnp.concatenate(biases)[None, :].astype(jnp.float32) # (1, B_COLS)   f32
    assert w_all.shape == (HID, W_COLS) and b_all.shape == (1, B_COLS)
    return w_all, b_all


def make_audio_encoder(params):
    """Pack parameters ONCE; return a jitted forward(x, mask) closing over the packed slabs."""
    w_all, b_all = pack_params(params)

    def forward(x, mask):
        """x: (B, L, N_MELS) float32; mask: (B, L) bool (True = padded). Returns (B, L, HID)."""
        # TODO(synk): level='global' branch (masked temporal mean + out_linear) not implemented;
        #             this kernel covers the module's default level='local'.
        keep = (~mask).astype(jnp.bfloat16).reshape(BL, 1)
        xk = jnp.concatenate([x.reshape(BL, N_MELS).astype(jnp.bfloat16), keep], axis=1)
        out = pl.pallas_call(
            audio_encoder_kernel,
            out_shape=jax.ShapeDtypeStruct((BL, HID), jnp.float32),
            # No grid / BlockSpecs: one invocation; each operand is a whole-array VMEM block
            # (total footprint ~30 KiB on any TPU generation).
            # TODO(synk): at larger B*L add a row grid with dimension_semantics=("parallel",)
            #             so blocks stay within VMEM and both v7x TensorCores are used.
        )(xk, w_all, b_all)
        return out.reshape(B, L, HID)

    return jax.jit(forward)


# ------------------------- pure-JAX references -------------------------

def reference_forward(params, x, mask):
    """f32, un-folded-BN reference faithful to the PyTorch module (eval mode, level='local')."""
    p = params
    keep = (~mask)[:, :, None].astype(jnp.float32)

    def conv1d_same(h, Wc, bc):        # h: (B, L, Cin), Wc: (Cout, Cin, K)
        pad = (K - 1) // 2
        hp = jnp.pad(h, ((0, 0), (pad, pad), (0, 0)))
        out = sum(jnp.einsum('blc,oc->blo', hp[:, k:k + L, :], Wc[:, :, k]) for k in range(K))
        return out + bc

    def bn_eval(h, bn):
        return (h - bn['mean']) / jnp.sqrt(bn['var'] + BN_EPS) * bn['gamma'] + bn['beta']

    h = jax.nn.relu(bn_eval(conv1d_same(x, p['w_pre'], p['b_pre']), p['bn_pre'])) * keep
    residual = h
    for blk in p['blocks']:
        h = jax.nn.relu(bn_eval(conv1d_same(h, blk['w1'], blk['b1']), blk['bn1']))
        h = jax.nn.relu(bn_eval(conv1d_same(h, blk['w2'], blk['b2']), blk['bn2']))
        h = h * keep + residual
        residual = h
    out = h @ p['w_out'].T + p['b_out']             # level='local'
    return out * keep


def reference_forward_bf16(params, x, mask):
    """Numerics-matched reference: BN folded into conv weights, bf16 matmul operands with
    f32 accumulation — identical rounding points to the kernel (tight check)."""
    p = params
    keep = (~mask)[:, :, None].astype(jnp.float32)

    def conv(h, w_cat, bias):          # h: (B, L, Cin) f32; w_cat: (Cin, 3*HID) f32 (folded)
        y = jnp.einsum('blc,cd->bld', h.astype(jnp.bfloat16), w_cat.astype(jnp.bfloat16),
                       preferred_element_type=jnp.float32)
        y0, y1, y2 = y[..., 0:HID], y[..., HID:2 * HID], y[..., 2 * HID:3 * HID]
        out = (jnp.pad(y0, ((0, 0), (1, 0), (0, 0)))[:, :L, :]     # out[t] += y0[t-1]
               + y1
               + jnp.pad(y2, ((0, 0), (0, 1), (0, 0)))[:, 1:, :]   # out[t] += y2[t+1]
               + bias)
        return jax.nn.relu(out)

    w_pre, b_pre = _fold_conv_bn(p['w_pre'], p['b_pre'], p['bn_pre'])
    h = conv(x, w_pre, b_pre) * keep
    residual = h
    for blk in p['blocks']:
        w1, b1 = _fold_conv_bn(blk['w1'], blk['b1'], blk['bn1'])
        w2, b2 = _fold_conv_bn(blk['w2'], blk['b2'], blk['bn2'])
        h = conv(h, w1, b1)
        h = conv(h, w2, b2)
        h = h * keep + residual
        residual = h
    out = jnp.einsum('blc,cd->bld', h.astype(jnp.bfloat16),
                     p['w_out'].T.astype(jnp.bfloat16),
                     preferred_element_type=jnp.float32) + p['b_out']
    return out * keep


if __name__ == "__main__":
    key = jax.random.PRNGKey(0)
    kp, kx = jax.random.split(key)
    params = init_params(kp)

    x = jax.random.normal(kx, (B, L, N_MELS), jnp.float32)
    lens = jnp.array([11, 16], dtype=jnp.int32)
    mask = jnp.arange(L)[None, :] >= lens[:, None]          # (B, L) bool, True = padded

    forward = make_audio_encoder(params)                    # weights packed once, not per call
    out = jax.block_until_ready(forward(x, mask))
    assert out.shape == (B, L, HID), out.shape

    # Tight check vs a pure-JAX emulation with identical numerics (folded BN, bf16 operands).
    ref_bf16 = reference_forward_bf16(params, x, mask)
    err_bf16 = jnp.max(jnp.abs(out - ref_bf16))
    assert jnp.allclose(out, ref_bf16, atol=1e-3, rtol=1e-3), (
        f"mismatch vs bf16-matched reference: max abs err = {err_bf16}")

    # Loose check vs the f32, PyTorch-faithful reference (tolerance covers bf16 rounding only).
    ref_f32 = reference_forward(params, x, mask)
    err_f32 = jnp.max(jnp.abs(out - ref_f32))
    assert jnp.allclose(out, ref_f32, atol=5e-2, rtol=5e-2), (
        f"mismatch vs f32 reference: max abs err = {err_f32}")

    print("KERNEL_OK")
</pallas_src>

<mosaic_0001>
module attributes {stable_mosaic.version = 11 : i64} {
  func.func @audio_encoder_kernel(%arg0: memref<32x33xbf16, #tpu.memory_space<vmem>>, %arg1: memref<32x320xbf16, #tpu.memory_space<vmem>>, %arg2: memref<1x128xf32, #tpu.memory_space<vmem>>, %arg3: memref<32x32xf32, #tpu.memory_space<vmem>>) attributes {dimension_semantics = [], scalar_prefetch = 0 : i64, scratch_operands = 0 : i64, tpu.core_type = #tpu.core_type<tc>} {
    %c0 = arith.constant 0 : index
    %c0_0 = arith.constant 0 : index
    %0 = vector.load %arg0[%c0, %c0_0] : memref<32x33xbf16, #tpu.memory_space<vmem>>, vector<32x33xbf16>
    %c0_1 = arith.constant 0 : index
    %c0_2 = arith.constant 0 : index
    %1 = vector.load %arg1[%c0_1, %c0_2] : memref<32x320xbf16, #tpu.memory_space<vmem>>, vector<32x320xbf16>
    %c0_3 = arith.constant 0 : index
    %c0_4 = arith.constant 0 : index
    %2 = vector.load %arg2[%c0_3, %c0_4] : memref<1x128xf32, #tpu.memory_space<vmem>>, vector<1x128xf32>
    %3 = vector.extract_strided_slice %0 {offsets = [0, 32], sizes = [32, 1], strides = [1, 1]} : vector<32x33xbf16> to vector<32x1xbf16>
    %4 = arith.extf %3 : vector<32x1xbf16> to vector<32x1xf32>
    %5 = vector.shape_cast %4 : vector<32x1xf32> to vector<32x1xf32>
    %6 = vector.broadcast %5 : vector<32x1xf32> to vector<32x32xf32>
    %7 = tpu.iota {dimensions = array<i32: 0>} : vector<32x32xi32>
    %c15_i32 = arith.constant 15 : i32
    %8 = vector.broadcast %c15_i32 : i32 to vector<32x32xi32>
    %9 = arith.andi %7, %8 : vector<32x32xi32>
    %c0_i32 = arith.constant 0 : i32
    %10 = vector.broadcast %c0_i32 : i32 to vector<32x32xi32>
    %11 = arith.cmpi ne, %9, %10 : vector<32x32xi32>
    %12 = arith.extui %11 : vector<32x32xi1> to vector<32x32xi32>
    %13 = arith.sitofp %12 : vector<32x32xi32> to vector<32x32xf32>
    %c15_i32_5 = arith.constant 15 : i32
    %14 = vector.broadcast %c15_i32_5 : i32 to vector<32x32xi32>
    %15 = arith.cmpi ne, %9, %14 : vector<32x32xi32>
    %16 = arith.extui %15 : vector<32x32xi1> to vector<32x32xi32>
    %17 = arith.sitofp %16 : vector<32x32xi32> to vector<32x32xf32>
    %18 = vector.extract_strided_slice %0 {offsets = [0, 0], sizes = [32, 32], strides = [1, 1]} : vector<32x33xbf16> to vector<32x32xbf16>
    %19 = vector.extract_strided_slice %1 {offsets = [0, 0], sizes = [32, 96], strides = [1, 1]} : vector<32x320xbf16> to vector<32x96xbf16>
    %cst = arith.constant dense<0.000000e+00> : vector<32x96xf32>
    %20 = tpu.matmul %18, %19, %cst {dimension_numbers = #tpu.dot_dimension_numbers<[1], [0], [0], [1], [0, 0, 1, 1], [], []>} : vector<32x32xbf16>, vector<32x96xbf16>, vector<32x96xf32> -> vector<32x96xf32>
    %21 = vector.extract_strided_slice %20 {offsets = [0, 0], sizes = [32, 32], strides = [1, 1]} : vector<32x96xf32> to vector<32x32xf32>
    %22 = vector.extract_strided_slice %20 {offsets = [0, 32], sizes = [32, 32], strides = [1, 1]} : vector<32x96xf32> to vector<32x32xf32>
    %23 = vector.extract_strided_slice %20 {offsets = [0, 64], sizes = [32, 32], strides = [1, 1]} : vector<32x96xf32> to vector<32x32xf32>
    %c1_i32 = arith.constant 1 : i32
    %24 = tpu.dynamic_rotate %21 by %c1_i32 dim 0 : vector<32x32xf32>, i32 -> vector<32x32xf32>
    %25 = arith.mulf %13, %24 : vector<32x32xf32>
    %26 = arith.addf %25, %22 : vector<32x32xf32>
    %c31_i32 = arith.constant 31 : i32
    %27 = tpu.dynamic_rotate %23 by %c31_i32 dim 0 : vector<32x32xf32>, i32 -> vector<32x32xf32>
    %28 = arith.mulf %17, %27 : vector<32x32xf32>
    %29 = arith.addf %26, %28 : vector<32x32xf32>
    %30 = vector.extract_strided_slice %2 {offsets = [0, 0], sizes = [1, 32], strides = [1, 1]} : vector<1x128xf32> to vector<1x32xf32>
    %31 = vector.broadcast %30 : vector<1x32xf32> to vector<32x32xf32>
    %32 = arith.addf %29, %31 : vector<32x32xf32>
    %cst_6 = arith.constant 0.000000e+00 : f32
    %33 = vector.broadcast %cst_6 : f32 to vector<32x32xf32>
    %34 = arith.maximumf %32, %33 : vector<32x32xf32>
    %35 = arith.mulf %34, %6 : vector<32x32xf32>
    %36 = arith.truncf %35 : vector<32x32xf32> to vector<32x32xbf16>
    %37 = vector.extract_strided_slice %1 {offsets = [0, 96], sizes = [32, 96], strides = [1, 1]} : vector<32x320xbf16> to vector<32x96xbf16>
    %cst_7 = arith.constant dense<0.000000e+00> : vector<32x96xf32>
    %38 = tpu.matmul %36, %37, %cst_7 {dimension_numbers = #tpu.dot_dimension_numbers<[1], [0], [0], [1], [0, 0, 1, 1], [], []>} : vector<32x32xbf16>, vector<32x96xbf16>, vector<32x96xf32> -> vector<32x96xf32>
    %39 = vector.extract_strided_slice %38 {offsets = [0, 0], sizes = [32, 32], strides = [1, 1]} : vector<32x96xf32> to vector<32x32xf32>
    %40 = vector.extract_strided_slice %38 {offsets = [0, 32], sizes = [32, 32], strides = [1, 1]} : vector<32x96xf32> to vector<32x32xf32>
    %41 = vector.extract_strided_slice %38 {offsets = [0, 64], sizes = [32, 32], strides = [1, 1]} : vector<32x96xf32> to vector<32x32xf32>
    %c1_i32_8 = arith.constant 1 : i32
    %42 = tpu.dynamic_rotate %39 by %c1_i32_8 dim 0 : vector<32x32xf32>, i32 -> vector<32x32xf32>
    %43 = arith.mulf %13, %42 : vector<32x32xf32>
    %44 = arith.addf %43, %40 : vector<32x32xf32>
    %c31_i32_9 = arith.constant 31 : i32
    %45 = tpu.dynamic_rotate %41 by %c31_i32_9 dim 0 : vector<32x32xf32>, i32 -> vector<32x32xf32>
    %46 = arith.mulf %17, %45 : vector<32x32xf32>
    %47 = arith.addf %44, %46 : vector<32x32xf32>
    %48 = vector.extract_strided_slice %2 {offsets = [0, 32], sizes = [1, 32], strides = [1, 1]} : vector<1x128xf32> to vector<1x32xf32>
    %49 = vector.broadcast %48 : vector<1x32xf32> to vector<32x32xf32>
    %50 = arith.addf %47, %49 : vector<32x32xf32>
    %cst_10 = arith.constant 0.000000e+00 : f32
    %51 = vector.broadcast %cst_10 : f32 to vector<32x32xf32>
    %52 = arith.maximumf %50, %51 : vector<32x32xf32>
    %53 = arith.truncf %52 : vector<32x32xf32> to vector<32x32xbf16>
    %54 = vector.extract_strided_slice %1 {offsets = [0, 192], sizes = [32, 96], strides = [1, 1]} : vector<32x320xbf16> to vector<32x96xbf16>
    %cst_11 = arith.constant dense<0.000000e+00> : vector<32x96xf32>
    %55 = tpu.matmul %53, %54, %cst_11 {dimension_numbers = #tpu.dot_dimension_numbers<[1], [0], [0], [1], [0, 0, 1, 1], [], []>} : vector<32x32xbf16>, vector<32x96xbf16>, vector<32x96xf32> -> vector<32x96xf32>
    %56 = vector.extract_strided_slice %55 {offsets = [0, 0], sizes = [32, 32], strides = [1, 1]} : vector<32x96xf32> to vector<32x32xf32>
    %57 = vector.extract_strided_slice %55 {offsets = [0, 32], sizes = [32, 32], strides = [1, 1]} : vector<32x96xf32> to vector<32x32xf32>
    %58 = vector.extract_strided_slice %55 {offsets = [0, 64], sizes = [32, 32], strides = [1, 1]} : vector<32x96xf32> to vector<32x32xf32>
    %c1_i32_12 = arith.constant 1 : i32
    %59 = tpu.dynamic_rotate %56 by %c1_i32_12 dim 0 : vector<32x32xf32>, i32 -> vector<32x32xf32>
    %60 = arith.mulf %13, %59 : vector<32x32xf32>
    %61 = arith.addf %60, %57 : vector<32x32xf32>
    %c31_i32_13 = arith.constant 31 : i32
    %62 = tpu.dynamic_rotate %58 by %c31_i32_13 dim 0 : vector<32x32xf32>, i32 -> vector<32x32xf32>
    %63 = arith.mulf %17, %62 : vector<32x32xf32>
    %64 = arith.addf %61, %63 : vector<32x32xf32>
    %65 = vector.extract_strided_slice %2 {offsets = [0, 64], sizes = [1, 32], strides = [1, 1]} : vector<1x128xf32> to vector<1x32xf32>
    %66 = vector.broadcast %65 : vector<1x32xf32> to vector<32x32xf32>
    %67 = arith.addf %64, %66 : vector<32x32xf32>
    %cst_14 = arith.constant 0.000000e+00 : f32
    %68 = vector.broadcast %cst_14 : f32 to vector<32x32xf32>
    %69 = arith.maximumf %67, %68 : vector<32x32xf32>
    %70 = arith.mulf %69, %6 : vector<32x32xf32>
    %71 = arith.addf %70, %35 : vector<32x32xf32>
    %72 = vector.extract_strided_slice %1 {offsets = [0, 288], sizes = [32, 32], strides = [1, 1]} : vector<32x320xbf16> to vector<32x32xbf16>
    %73 = vector.extract_strided_slice %2 {offsets = [0, 96], sizes = [1, 32], strides = [1, 1]} : vector<1x128xf32> to vector<1x32xf32>
    %74 = arith.truncf %71 : vector<32x32xf32> to vector<32x32xbf16>
    %cst_15 = arith.constant dense<0.000000e+00> : vector<32x32xf32>
    %75 = tpu.matmul %74, %72, %cst_15 {dimension_numbers = #tpu.dot_dimension_numbers<[1], [0], [0], [1], [0, 0, 1, 1], [], []>} : vector<32x32xbf16>, vector<32x32xbf16>, vector<32x32xf32> -> vector<32x32xf32>
    %76 = vector.broadcast %73 : vector<1x32xf32> to vector<32x32xf32>
    %77 = arith.addf %75, %76 : vector<32x32xf32>
    %78 = arith.mulf %77, %6 : vector<32x32xf32>
    %c0_16 = arith.constant 0 : index
    %c0_17 = arith.constant 0 : index
    %79 = vector.load %arg3[%c0_16, %c0_17] : memref<32x32xf32, #tpu.memory_space<vmem>>, vector<32x32xf32>
    tpu.vector_store %arg3[%c0_16, %c0_17], %78 {strides = array<i32>} : memref<32x32xf32, #tpu.memory_space<vmem>>, vector<32x32xf32>,
    return
  }
}

</mosaic_0001>

<llo_original>
// kernel: forward.1
$region0: #{forward.1}
  #allocation0 [shape = 'u32[]', space=smem, size = 0x4, offset = 0x4, fixed_abs, tag = 'smem constant byte address 0x4 - core index']
  #allocation1 [shape = 'u32[144,128]{1,0:T(1,128)}', space=vmem, size = 0x12000, scoped, tag = 'internal scratch']
  %s0 = inlined_call_operand.vmem [shape: bf16[32,33], index: 0, kind: input, shape index: {}]
  %s1 = inlined_call_operand.vmem [shape: bf16[32,320], index: 1, kind: input, shape index: {}]
  %s2 = inlined_call_operand.vmem [shape: f32[1,128], index: 2, kind: input, shape index: {}]
  %s3 = inlined_call_operand.hbm [shape: f32[32,32], index: 3, kind: output, shape index: {}]
  %s4 = sld [smem:[#allocation0]]
  $region22: #{forward.1} parent=0
    _
  %s6 = ssub.s32 1, %s4
  %s7 = scalar_select 0, %s6, %s4
  $region1: #{forward.1} parent=0
    #allocation2 [shape = 'u8[16384]{0}', space=vmem, size = 0x4000, scoped, tag = 'output window, operand 0, single buffered']
    #allocation3 [shape = 's32[1]{0}', space=sflag, size = 0x4, scoped, tag = 'scoped memory for forward.1']
    %8 = vsyncpa [#allocation3], 0
    // Predicated region
    $region2: #{forward.1} parent=1 // pred_check
      _
    $region3: #{forward.1} parent=1 // pred_check_branch
      %10 = sbr.rel (0) target = $region5
    $region4: #{forward.1} parent=1 // pred_region
      _
    $region5: #{forward.1} parent=1 // pred_fallthru
      _
    // Predicated region
    $region6: #{forward.1} parent=1 // pred_check
      _
    $region7: #{forward.1} parent=1 // pred_check_branch
      %12 = sbr.rel (0) target = $region9
    $region8: #{forward.1} parent=1 // pred_region
      _
    $region9: #{forward.1} parent=1 // pred_fallthru
      _
    // Predicated region
    $region10: #{forward.1} parent=1 // pred_check
      _
    $region11: #{forward.1} parent=1 // pred_check_branch
      %14 = sbr.rel (0) target = $region13
    $region12: #{forward.1} parent=1 // pred_region
      _
    $region13: #{forward.1} parent=1 // pred_fallthru
      _
    %v16 = vld [vmem:[%s0] sm:$0xf]
    %v17 = vld [vmem:[%s0 + $0x4] sm:$0xf]
    %v18 = vld [vmem:[%s0 + $0x8] sm:$0xf]
    %v19 = vld [vmem:[%s0 + $0xc] sm:$0xf]
    %v20 = vld [vmem:[%s1] sm:$0xff]
    %v21 = vld [vmem:[%s1 + $0x8] sm:$0xf]
    %v22 = vld [vmem:[%s1 + $0xc] sm:$0xff]
    %v23 = vld [vmem:[%s1 + $0x14] sm:$0xf]
    %v24 = vld [vmem:[%s1 + $0x18] sm:$0xff]
    %v25 = vld [vmem:[%s1 + $0x20] sm:$0xf]
    %v26 = vld [vmem:[%s1 + $0x24] sm:$0xff]
    %v27 = vld [vmem:[%s1 + $0x2c] sm:$0xf]
    %v28 = vld [vmem:[%s2] sm:$0x1]
    %v29 = vunpack.c.l.bf16 %v16
    %v30 = vunpack.c.l.bf16 %v17
    %v31 = vunpack.c.l.bf16 %v18
    %v32 = vunpack.c.l.bf16 %v19
    %34 = vset.pattern.permute.xlu0 32
    %35 = vperm.xlu0 %34, %v29
    %v36 = vpop.permute.xlu0 %35
    %39 = vset.pattern.permute.xlu0 32
    %40 = vperm.xlu0 %39, %v30
    %v41 = vpop.permute.xlu0 %40
    %44 = vset.pattern.permute.xlu0 32
    %45 = vperm.xlu0 %44, %v31
    %v46 = vpop.permute.xlu0 %45
    %49 = vset.pattern.permute.xlu0 32
    %50 = vperm.xlu0 %49, %v32
    %v51 = vpop.permute.xlu0 %50
    %v53 = vlaneseq
    %v54 = vshrl.u32 %v53, 7
    %v55 = vadd.s32 %v54, 8
    %v56 = vadd.s32 %v54, 16
    %v57 = vadd.s32 %v54, 24
    %v58 = vand.u32 %v54, 15
    %v59 = vand.u32 %v55, 15
    %v60 = vand.u32 %v56, 15
    %v61 = vand.u32 %v57, 15
    %vm62 = vcmp.ne.s32.totalorder %v58, 0
    %vm63 = vcmp.ne.s32.totalorder %v59, 0
    %vm64 = vcmp.ne.s32.totalorder %v60, 0
    %vm65 = vcmp.ne.s32.totalorder %v61, 0
    %v66 = vsel %vm62, 1, 0
    %v67 = vsel %vm63, 1, 0
    %v68 = vsel %vm64, 1, 0
    %v69 = vsel %vm65, 1, 0
    %v70 = vcvt.s32.f32 %v66
    %v71 = vcvt.s32.f32 %v67
    %v72 = vcvt.s32.f32 %v68
    %v73 = vcvt.s32.f32 %v69
    %vm74 = vcmp.ne.s32.totalorder %v58, 15
    %vm75 = vcmp.ne.s32.totalorder %v59, 15
    %vm76 = vcmp.ne.s32.totalorder %v60, 15
    %vm77 = vcmp.ne.s32.totalorder %v61, 15
    %v78 = vsel %vm74, 1, 0
    %v79 = vsel %vm75, 1, 0
    %v80 = vsel %vm76, 1, 0
    %v81 = vsel %vm77, 1, 0
    %v82 = vcvt.s32.f32 %v78
    %v83 = vcvt.s32.f32 %v79
    %v84 = vcvt.s32.f32 %v80
    %v85 = vcvt.s32.f32 %v81
    %v90 = vunpack.c.l.b16 %v16
    %v91 = vunpack.c.l.b16 %v17
    %v92 = vunpack.c.l.b16 %v18
    %v93 = vunpack.c.l.b16 %v19
    %v94 = vpack.c.b16 %v91, %v90
    %v95 = vpack.c.b16 %v93, %v92
    %v100 = vunpack.c.l.b16 %v20
    %v101 = vunpack.c.l.b16 %v22
    %v102 = vunpack.c.l.b16 %v24
    %v103 = vunpack.c.l.b16 %v26
    %v104 = vpack.c.b16 %v101, %v100
    %v105 = vpack.c.b16 %v103, %v102
    %vm108 = vcmask 261120
    %v110 = vsel %vm108, %v94, 0
    %v113 = vsel %vm108, %v95, 0
    %115 = vmatprep.subr.bf16.mxu0 0
    %116 = vmatpush1.bf16.msra.mxu0 %v104
    %117 = vmatprep.subr.bf16.mxu0 0
    %118 = vmatpush1.bf16.msra.mxu0 %v105
    %119 = vmatprep.subr.bf16.mxu0 0
    %120 = vmatpush1.bf16.msra.mxu0 0
    %121 = vmatprep.subr.bf16.mxu0 0
    %122 = vmatpush1.bf16.msra.mxu0 0
    %123 = vmatprep.subr.bf16.mxu0 0
    %124 = vmatpush1.bf16.msra.mxu0 0
    %125 = vmatprep.subr.bf16.mxu0 0
    %126 = vmatpush1.bf16.msra.mxu0 0
    %127 = vmatprep.subr.bf16.mxu0 0
    %128 = vmatpush1.bf16.msra.mxu0 0
    %129 = vmatprep.subr.bf16.mxu0 0
    %130 = vmatpush1.bf16.msra.mxu0 0
    %131 = vmatprep.subr.bf16.mxu0 0
    %132 = vmatpush1.bf16.msra.mxu0 0
    %133 = vmatprep.subr.bf16.mxu0 0
    %134 = vmatpush1.bf16.msra.mxu0 0
    %135 = vmatprep.subr.bf16.mxu0 0
    %136 = vmatpush1.bf16.msra.mxu0 0
    %137 = vmatprep.subr.bf16.mxu0 0
    %138 = vmatpush1.bf16.msra.mxu0 0
    %139 = vmatprep.subr.bf16.mxu0 0
    %140 = vmatpush1.bf16.msra.mxu0 0
    %141 = vmatprep.subr.bf16.mxu0 0
    %142 = vmatpush1.bf16.msra.mxu0 0
    %143 = vmatprep.subr.bf16.mxu0 0
    %144 = vmatpush1.bf16.msra.mxu0 0
    %145 = vmatprep.subr.bf16.mxu0 0
    %146 = vmatpush1.bf16.msra.mxu0 0
    %147 = vmatprep.mubr.bf16.mxu0 0
    %148 = vmatmul.mubr.bf16.gmra.mrb[0].mxu0 %v110
    %v149 = vpop.f32.mrb[0].mxu0
    %v150 = vadd.f32 0.0, %v149
    %v151 = vpop.f32.mrb[0].mxu0
    %v152 = vpop.f32.mrb[0].mxu0
    %v153 = vadd.f32 0.0, %v152
    %v154 = vpop.f32.mrb[0].mxu0
    %155 = vmatprep.mubr.bf16.mxu0 0
    %156 = vmatmul.mubr.bf16.gmra.mrb[0].mxu0 %v113
    %v157 = vpop.f32.mrb[0].mxu0
    %v158 = vadd.f32 0.0, %v157
    %v159 = vpop.f32.mrb[0].mxu0
    %v160 = vpop.f32.mrb[0].mxu0
    %v161 = vadd.f32 0.0, %v160
    %v162 = vpop.f32.mrb[0].mxu0
    %163 = vdwg.mxu0
    %v164 = vrot.slane %v150, 7
    %v165 = vrot.slane %v153, 7
    %v166 = vrot.slane %v158, 7
    %v167 = vrot.slane %v161, 7
    %vm168 = vcmp.lt.s32.totalorder %v54, 1
    %v169 = vsel %vm168, %v166, %v167
    %v170 = vsel %vm168, %v165, %v166
    %v171 = vsel %vm168, %v164, %v165
    %v172 = vsel %vm168, %v167, %v164
    %v173 = vmul.f32 %v70, %v172
    %v174 = vmul.f32 %v71, %v171
    %v175 = vmul.f32 %v72, %v170
    %v176 = vmul.f32 %v73, %v169
    %181 = vrot.lane.b32.xlu0 %v150, 96
    %v182 = vpop.permute.xlu0 %181
    %183 = vrot.lane.b32.xlu0 %v153, 96
    %v184 = vpop.permute.xlu0 %183
    %185 = vrot.lane.b32.xlu0 %v158, 96
    %v186 = vpop.permute.xlu0 %185
    %187 = vrot.lane.b32.xlu0 %v161, 96
    %v188 = vpop.permute.xlu0 %187
    %v193 = vadd.f32 %v173, %v182
    %v194 = vadd.f32 %v174, %v184
    %v195 = vadd.f32 %v175, %v186
    %v196 = vadd.f32 %v176, %v188
    %197 = vrot.lane.b32.xlu0 %v150, 64
    %v198 = vpop.permute.xlu0 %197
    %199 = vrot.lane.b32.xlu0 %v153, 64
    %v200 = vpop.permute.xlu0 %199
    %201 = vrot.lane.b32.xlu0 %v158, 64
    %v202 = vpop.permute.xlu0 %201
    %203 = vrot.lane.b32.xlu0 %v161, 64
    %v204 = vpop.permute.xlu0 %203
    %v209 = vrot.slane %v198, 1
    %v210 = vrot.slane %v200, 1
    %v211 = vrot.slane %v202, 1
    %v212 = vrot.slane %v204, 1
    %vm213 = vcmp.lt.s32.totalorder %v54, 7
    %v214 = vsel %vm213, %v211, %v212
    %v215 = vsel %vm213, %v210, %v211
    %v216 = vsel %vm213, %v209, %v210
    %v217 = vsel %vm213, %v212, %v209
    %v218 = vmul.f32 %v82, %v216
    %v219 = vmul.f32 %v83, %v215
    %v220 = vmul.f32 %v84, %v214
    %v221 = vmul.f32 %v85, %v217
    %v222 = vadd.f32 %v193, %v218
    %v223 = vadd.f32 %v194, %v219
    %v224 = vadd.f32 %v195, %v220
    %v225 = vadd.f32 %v196, %v221
    %v227 = vlaneseq
    %v228 = vshrl.u32 %v227, 7
    %v229 = vsub.s32 0, %v228
    %v230 = vrot.slane %v28, %v229
    %v232 = vadd.f32 %v222, %v230
    %v233 = vadd.f32 %v223, %v230
    %v234 = vadd.f32 %v224, %v230
    %v235 = vadd.f32 %v225, %v230
    %v236 = vmax.f32 %v232, 0.0
    %v237 = vmax.f32 %v233, 0.0
    %v238 = vmax.f32 %v234, 0.0
    %v239 = vmax.f32 %v235, 0.0
    %v240 = vmul.f32 %v236, %v36
    %v241 = vmul.f32 %v237, %v41
    %v242 = vmul.f32 %v238, %v46
    %v243 = vmul.f32 %v239, %v51
    %v244 = vpack.c.bf16 %v241, %v240
    %v245 = vpack.c.bf16 %v243, %v242
    %v246 = vunpack.c.h.b16 %v20
    %v247 = vunpack.c.h.b16 %v22
    %v248 = vunpack.c.h.b16 %v24
    %v249 = vunpack.c.h.b16 %v26
    %v250 = vpack.c.b16 %v247, %v246
    %v251 = vpack.c.b16 %v249, %v248
    %252 = vrot.lane.b32.xlu0 %v104, 32
    %v253 = vpop.permute.xlu0 %252
    %254 = vrot.lane.b32.xlu0 %v250, 32
    %v255 = vpop.permute.xlu0 %254
    %256 = vrot.lane.b32.xlu0 %v105, 32
    %v257 = vpop.permute.xlu0 %256
    %258 = vrot.lane.b32.xlu0 %v251, 32
    %v259 = vpop.permute.xlu0 %258
    %vm260 = vcmask 261120
    %v261 = vsel %vm260, %v253, %v255
    %v262 = vsel %vm260, %v257, %v259
    %v266 = vsel %vm108, %v244, 0
    %v269 = vsel %vm108, %v245, 0
    %271 = vmatprep.subr.bf16.mxu0 0
    %272 = vmatpush1.bf16.msra.mxu0 %v261
    %273 = vmatprep.subr.bf16.mxu0 0
    %274 = vmatpush1.bf16.msra.mxu0 %v262
    %275 = vmatprep.subr.bf16.mxu0 0
    %276 = vmatpush1.bf16.msra.mxu0 0
    %277 = vmatprep.subr.bf16.mxu0 0
    %278 = vmatpush1.bf16.msra.mxu0 0
    %279 = vmatprep.subr.bf16.mxu0 0
    %280 = vmatpush1.bf16.msra.mxu0 0
    %281 = vmatprep.subr.bf16.mxu0 0
    %282 = vmatpush1.bf16.msra.mxu0 0
    %283 = vmatprep.subr.bf16.mxu0 0
    %284 = vmatpush1.bf16.msra.mxu0 0
    %285 = vmatprep.subr.bf16.mxu0 0
    %286 = vmatpush1.bf16.msra.mxu0 0
    %287 = vmatprep.subr.bf16.mxu0 0
    %288 = vmatpush1.bf16.msra.mxu0 0
    %289 = vmatprep.subr.bf16.mxu0 0
    %290 = vmatpush1.bf16.msra.mxu0 0
    %291 = vmatprep.subr.bf16.mxu0 0
    %292 = vmatpush1.bf16.msra.mxu0 0
    %293 = vmatprep.subr.bf16.mxu0 0
    %294 = vmatpush1.bf16.msra.mxu0 0
    %295 = vmatprep.subr.bf16.mxu0 0
    %296 = vmatpush1.bf16.msra.mxu0 0
    %297 = vmatprep.subr.bf16.mxu0 0
    %298 = vmatpush1.bf16.msra.mxu0 0
    %299 = vmatprep.subr.bf16.mxu0 0
    %300 = vmatpush1.bf16.msra.mxu0 0
    %301 = vmatprep.subr.bf16.mxu0 0
    %302 = vmatpush1.bf16.msra.mxu0 0
    %303 = vmatprep.mubr.bf16.mxu0 0
    %304 = vmatmul.mubr.bf16.gmra.mrb[0].mxu0 %v266
    %v305 = vpop.f32.mrb[0].mxu0
    %v306 = vadd.f32 0.0, %v305
    %v307 = vpop.f32.mrb[0].mxu0
    %v308 = vpop.f32.mrb[0].mxu0
    %v309 = vadd.f32 0.0, %v308
    %v310 = vpop.f32.mrb[0].mxu0
    %311 = vmatprep.mubr.bf16.mxu0 0
    %312 = vmatmul.mubr.bf16.gmra.mrb[0].mxu0 %v269
    %v313 = vpop.f32.mrb[0].mxu0
    %v314 = vadd.f32 0.0, %v313
    %v315 = vpop.f32.mrb[0].mxu0
    %v316 = vpop.f32.mrb[0].mxu0
    %v317 = vadd.f32 0.0, %v316
    %v318 = vpop.f32.mrb[0].mxu0
    %319 = vdwg.mxu0
    %v320 = vrot.slane %v306, 7
    %v321 = vrot.slane %v309, 7
    %v322 = vrot.slane %v314, 7
    %v323 = vrot.slane %v317, 7
    %v324 = vsel %vm168, %v322, %v323
    %v325 = vsel %vm168, %v321, %v322
    %v326 = vsel %vm168, %v320, %v321
    %v327 = vsel %vm168, %v323, %v320
    %v328 = vmul.f32 %v70, %v327
    %v329 = vmul.f32 %v71, %v326
    %v330 = vmul.f32 %v72, %v325
    %v331 = vmul.f32 %v73, %v324
    %336 = vrot.lane.b32.xlu0 %v306, 96
    %v337 = vpop.permute.xlu0 %336
    %338 = vrot.lane.b32.xlu0 %v309, 96
    %v339 = vpop.permute.xlu0 %338
    %340 = vrot.lane.b32.xlu0 %v314, 96
    %v341 = vpop.permute.xlu0 %340
    %342 = vrot.lane.b32.xlu0 %v317, 96
    %v343 = vpop.permute.xlu0 %342
    %v348 = vadd.f32 %v328, %v337
    %v349 = vadd.f32 %v329, %v339
    %v350 = vadd.f32 %v330, %v341
    %v351 = vadd.f32 %v331, %v343
    %352 = vrot.lane.b32.xlu0 %v306, 64
    %v353 = vpop.permute.xlu0 %352
    %354 = vrot.lane.b32.xlu0 %v309, 64
    %v355 = vpop.permute.xlu0 %354
    %356 = vrot.lane.b32.xlu0 %v314, 64
    %v357 = vpop.permute.xlu0 %356
    %358 = vrot.lane.b32.xlu0 %v317, 64
    %v359 = vpop.permute.xlu0 %358
    %v364 = vrot.slane %v353, 1
    %v365 = vrot.slane %v355, 1
    %v366 = vrot.slane %v357, 1
    %v367 = vrot.slane %v359, 1
    %v368 = vsel %vm213, %v366, %v367
    %v369 = vsel %vm213, %v365, %v366
    %v370 = vsel %vm213, %v364, %v365
    %v371 = vsel %vm213, %v367, %v364
    %v372 = vmul.f32 %v82, %v370
    %v373 = vmul.f32 %v83, %v369
    %v374 = vmul.f32 %v84, %v368
    %v375 = vmul.f32 %v85, %v371
    %v376 = vadd.f32 %v348, %v372
    %v377 = vadd.f32 %v349, %v373
    %v378 = vadd.f32 %v350, %v374
    %v379 = vadd.f32 %v351, %v375
    %380 = vrot.lane.b32.xlu0 %v230, 96
    %v381 = vpop.permute.xlu0 %380
    %v383 = vadd.f32 %v376, %v381
    %v384 = vadd.f32 %v377, %v381
    %v385 = vadd.f32 %v378, %v381
    %v386 = vadd.f32 %v379, %v381
    %v387 = vmax.f32 %v383, 0.0
    %v388 = vmax.f32 %v384, 0.0
    %v389 = vmax.f32 %v385, 0.0
    %v390 = vmax.f32 %v386, 0.0
    %v391 = vpack.c.bf16 %v388, %v387
    %v392 = vpack.c.bf16 %v390, %v389
    %v397 = vunpack.c.l.b16 %v21
    %v398 = vunpack.c.l.b16 %v23
    %v399 = vunpack.c.l.b16 %v25
    %v400 = vunpack.c.l.b16 %v27
    %v401 = vpack.c.b16 %v398, %v397
    %v402 = vpack.c.b16 %v400, %v399
    %403 = vrot.lane.b32.xlu0 %v250, 64
    %v404 = vpop.permute.xlu0 %403
    %405 = vrot.lane.b32.xlu0 %v401, 64
    %v406 = vpop.permute.xlu0 %405
    %407 = vrot.lane.b32.xlu0 %v251, 64
    %v408 = vpop.permute.xlu0 %407
    %409 = vrot.lane.b32.xlu0 %v402, 64
    %v410 = vpop.permute.xlu0 %409
    %vm411 = vcmask 523264
    %v412 = vsel %vm411, %v404, %v406
    %v413 = vsel %vm411, %v408, %v410
    %v417 = vsel %vm108, %v391, 0
    %v420 = vsel %vm108, %v392, 0
    %422 = vmatprep.subr.bf16.mxu0 0
    %423 = vmatpush1.bf16.msra.mxu0 %v412
    %424 = vmatprep.subr.bf16.mxu0 0
    %425 = vmatpush1.bf16.msra.mxu0 %v413
    %426 = vmatprep.subr.bf16.mxu0 0
    %427 = vmatpush1.bf16.msra.mxu0 0
    %428 = vmatprep.subr.bf16.mxu0 0
    %429 = vmatpush1.bf16.msra.mxu0 0
    %430 = vmatprep.subr.bf16.mxu0 0
    %431 = vmatpush1.bf16.msra.mxu0 0
    %432 = vmatprep.subr.bf16.mxu0 0
    %433 = vmatpush1.bf16.msra.mxu0 0
    %434 = vmatprep.subr.bf16.mxu0 0
    %435 = vmatpush1.bf16.msra.mxu0 0
    %436 = vmatprep.subr.bf16.mxu0 0
    %437 = vmatpush1.bf16.msra.mxu0 0
    %438 = vmatprep.subr.bf16.mxu0 0
    %439 = vmatpush1.bf16.msra.mxu0 0
    %440 = vmatprep.subr.bf16.mxu0 0
    %441 = vmatpush1.bf16.msra.mxu0 0
    %442 = vmatprep.subr.bf16.mxu0 0
    %443 = vmatpush1.bf16.msra.mxu0 0
    %444 = vmatprep.subr.bf16.mxu0 0
    %445 = vmatpush1.bf16.msra.mxu0 0
    %446 = vmatprep.subr.bf16.mxu0 0
    %447 = vmatpush1.bf16.msra.mxu0 0
    %448 = vmatprep.subr.bf16.mxu0 0
    %449 = vmatpush1.bf16.msra.mxu0 0
    %450 = vmatprep.subr.bf16.mxu0 0
    %451 = vmatpush1.bf16.msra.mxu0 0
    %452 = vmatprep.subr.bf16.mxu0 0
    %453 = vmatpush1.bf16.msra.mxu0 0
    %454 = vmatprep.mubr.bf16.mxu0 0
    %455 = vmatmul.mubr.bf16.gmra.mrb[0].mxu0 %v417
    %v456 = vpop.f32.mrb[0].mxu0
    %v457 = vadd.f32 0.0, %v456
    %v458 = vpop.f32.mrb[0].mxu0
    %v459 = vpop.f32.mrb[0].mxu0
    %v460 = vadd.f32 0.0, %v459
    %v461 = vpop.f32.mrb[0].mxu0
    %462 = vmatprep.mubr.bf16.mxu0 0
    %463 = vmatmul.mubr.bf16.gmra.mrb[0].mxu0 %v420
    %v464 = vpop.f32.mrb[0].mxu0
    %v465 = vadd.f32 0.0, %v464
    %v466 = vpop.f32.mrb[0].mxu0
    %v467 = vpop.f32.mrb[0].mxu0
    %v468 = vadd.f32 0.0, %v467
    %v469 = vpop.f32.mrb[0].mxu0
    %470 = vdwg.mxu0
    %v471 = vrot.slane %v457, 7
    %v472 = vrot.slane %v460, 7
    %v473 = vrot.slane %v465, 7
    %v474 = vrot.slane %v468, 7
    %v475 = vsel %vm168, %v473, %v474
    %v476 = vsel %vm168, %v472, %v473
    %v477 = vsel %vm168, %v471, %v472
    %v478 = vsel %vm168, %v474, %v471
    %v479 = vmul.f32 %v70, %v478
    %v480 = vmul.f32 %v71, %v477
    %v481 = vmul.f32 %v72, %v476
    %v482 = vmul.f32 %v73, %v475
    %487 = vrot.lane.b32.xlu0 %v457, 96
    %v488 = vpop.permute.xlu0 %487
    %489 = vrot.lane.b32.xlu0 %v460, 96
    %v490 = vpop.permute.xlu0 %489
    %491 = vrot.lane.b32.xlu0 %v465, 96
    %v492 = vpop.permute.xlu0 %491
    %493 = vrot.lane.b32.xlu0 %v468, 96
    %v494 = vpop.permute.xlu0 %493
    %v499 = vadd.f32 %v479, %v488
    %v500 = vadd.f32 %v480, %v490
    %v501 = vadd.f32 %v481, %v492
    %v502 = vadd.f32 %v482, %v494
    %503 = vrot.lane.b32.xlu0 %v457, 64
    %v504 = vpop.permute.xlu0 %503
    %505 = vrot.lane.b32.xlu0 %v460, 64
    %v506 = vpop.permute.xlu0 %505
    %507 = vrot.lane.b32.xlu0 %v465, 64
    %v508 = vpop.permute.xlu0 %507
    %509 = vrot.lane.b32.xlu0 %v468, 64
    %v510 = vpop.permute.xlu0 %509
    %v515 = vrot.slane %v504, 1
    %v516 = vrot.slane %v506, 1
    %v517 = vrot.slane %v508, 1
    %v518 = vrot.slane %v510, 1
    %v519 = vsel %vm213, %v517, %v518
    %v520 = vsel %vm213, %v516, %v517
    %v521 = vsel %vm213, %v515, %v516
    %v522 = vsel %vm213, %v518, %v515
    %v523 = vmul.f32 %v82, %v521
    %v524 = vmul.f32 %v83, %v520
    %v525 = vmul.f32 %v84, %v519
    %v526 = vmul.f32 %v85, %v522
    %v527 = vadd.f32 %v499, %v523
    %v528 = vadd.f32 %v500, %v524
    %v529 = vadd.f32 %v501, %v525
    %v530 = vadd.f32 %v502, %v526
    %531 = vrot.lane.b32.xlu0 %v230, 64
    %v532 = vpop.permute.xlu0 %531
    %v534 = vadd.f32 %v527, %v532
    %v535 = vadd.f32 %v528, %v532
    %v536 = vadd.f32 %v529, %v532
    %v537 = vadd.f32 %v530, %v532
    %v538 = vmax.f32 %v534, 0.0
    %v539 = vmax.f32 %v535, 0.0
    %v540 = vmax.f32 %v536, 0.0
    %v541 = vmax.f32 %v537, 0.0
    %v542 = vmul.f32 %v538, %v36
    %v543 = vmul.f32 %v539, %v41
    %v544 = vmul.f32 %v540, %v46
    %v545 = vmul.f32 %v541, %v51
    %v546 = vadd.f32 %v542, %v240
    %v547 = vadd.f32 %v543, %v241
    %v548 = vadd.f32 %v544, %v242
    %v549 = vadd.f32 %v545, %v243
    %v550 = vpack.c.bf16 %v547, %v546
    %v551 = vpack.c.bf16 %v549, %v548
    %552 = vrot.lane.b32.xlu0 %v401, 96
    %v553 = vpop.permute.xlu0 %552
    %554 = vrot.lane.b32.xlu0 %v402, 96
    %v555 = vpop.permute.xlu0 %554
    %558 = vrot.lane.b32.xlu0 %v230, 32
    %v559 = vpop.permute.xlu0 %558
    %v562 = vsel %vm108, %v550, 0
    %v565 = vsel %vm108, %v551, 0
    %567 = vmatprep.subr.bf16.mxu0 0
    %568 = vmatpush1.bf16.msra.mxu0 %v553
    %569 = vmatprep.subr.bf16.mxu0 0
    %570 = vmatpush1.bf16.msra.mxu0 %v555
    %571 = vmatprep.subr.bf16.mxu0 0
    %572 = vmatpush1.bf16.msra.mxu0 0
    %573 = vmatprep.subr.bf16.mxu0 0
    %574 = vmatpush1.bf16.msra.mxu0 0
    %575 = vmatprep.subr.bf16.mxu0 0
    %576 = vmatpush1.bf16.msra.mxu0 0
    %577 = vmatprep.subr.bf16.mxu0 0
    %578 = vmatpush1.bf16.msra.mxu0 0
    %579 = vmatprep.subr.bf16.mxu0 0
    %580 = vmatpush1.bf16.msra.mxu0 0
    %581 = vmatprep.subr.bf16.mxu0 0
    %582 = vmatpush1.bf16.msra.mxu0 0
    %583 = vmatprep.subr.bf16.mxu0 0
    %584 = vmatpush1.bf16.msra.mxu0 0
    %585 = vmatprep.subr.bf16.mxu0 0
    %586 = vmatpush1.bf16.msra.mxu0 0
    %587 = vmatprep.subr.bf16.mxu0 0
    %588 = vmatpush1.bf16.msra.mxu0 0
    %589 = vmatprep.subr.bf16.mxu0 0
    %590 = vmatpush1.bf16.msra.mxu0 0
    %591 = vmatprep.subr.bf16.mxu0 0
    %592 = vmatpush1.bf16.msra.mxu0 0
    %593 = vmatprep.subr.bf16.mxu0 0
    %594 = vmatpush1.bf16.msra.mxu0 0
    %595 = vmatprep.subr.bf16.mxu0 0
    %596 = vmatpush1.bf16.msra.mxu0 0
    %597 = vmatprep.subr.bf16.mxu0 0
    %598 = vmatpush1.bf16.msra.mxu0 0
    %599 = vmatprep.mubr.bf16.mxu0 0
    %600 = vmatmul.mubr.bf16.gmra.mrb[0].mxu0 %v562
    %v601 = vpop.f32.mrb[0].mxu0
    %v602 = vadd.f32 %v559, %v601
    %v603 = vpop.f32.mrb[0].mxu0
    %v604 = vpop.f32.mrb[0].mxu0
    %v605 = vadd.f32 %v559, %v604
    %v606 = vpop.f32.mrb[0].mxu0
    %607 = vmatprep.mubr.bf16.mxu0 0
    %608 = vmatmul.mubr.bf16.gmra.mrb[0].mxu0 %v565
    %v609 = vpop.f32.mrb[0].mxu0
    %v610 = vadd.f32 %v559, %v609
    %v611 = vpop.f32.mrb[0].mxu0
    %v612 = vpop.f32.mrb[0].mxu0
    %v613 = vadd.f32 %v559, %v612
    %v614 = vpop.f32.mrb[0].mxu0
    %615 = vdwg.mxu0
    %v616 = vmul.f32 %v602, %v36
    %v617 = vmul.f32 %v605, %v41
    %v618 = vmul.f32 %v610, %v46
    %v619 = vmul.f32 %v613, %v51
    %620 = vst.msk [vmem:[#allocation2] sm:$0xff] %vm108, %v616
    %621 = vst.msk [vmem:[#allocation2 + $0x8] sm:$0xff] %vm108, %v617
    %622 = vst.msk [vmem:[#allocation2 + $0x10] sm:$0xff] %vm108, %v618
    %623 = vst.msk [vmem:[#allocation2 + $0x18] sm:$0xff] %vm108, %v619
    // Predicated region
    $region14: #{forward.1} parent=1 // pred_check
      _
    $region15: #{forward.1} parent=1 // pred_check_branch
      %625 = sbr.rel (0) target = $region17
    $region16: #{forward.1} parent=1 // pred_region
      %s627 = ssub.s32 512, 512
      %628 = vsyncadd [#allocation3], %s627
      %s629 = sshll.u32 [#allocation2], 4
      %s630 = int_to_ptr.vmem [resolvable:$true] %s629
      %635 = dma.vmem_to_hbm [thread:$0]  %s630, 512, %s3, [#allocation3], 128, 128, 8
    $region17: #{forward.1} parent=1 // pred_fallthru
      _
    // Predicated region
    $region18: #{forward.1} parent=1 // pred_check
      _
    $region19: #{forward.1} parent=1 // pred_check_branch
      %637 = sbr.rel (0) target = $region21
    $region20: #{forward.1} parent=1 // pred_region
      %638 = dma.done [#allocation3], 512
    $region21: #{forward.1} parent=1 // pred_fallthru
      _
    %639 = vsyncpa [#allocation3], 1

</llo_original>
